<compile_context>
chip_gen: v7x
topology: tpu7x:2x2x1
jax: 0.10.0
libtpu: 0.0.40
codegen_flags: <defaults>
</compile_context>

<pallas_src>
import math
import functools

import jax
import jax.numpy as jnp
from jax.experimental import pallas as pl
from jax.experimental.pallas import tpu as pltpu


def _jsd_partials_kernel(x_ref, out_ref, *,
                         eps: float, n_total: int, tn: int, need_mask: bool):
    """Per-tile partial sums: out_ref[0,:] = sum_rows(x), out_ref[1,:] = sum_rows(x*log(x+eps))."""
    x = x_ref[...].astype(jnp.float32)                       # (tn, D)

    if need_mask:
        # Zero rows past N on the last (partial) tile before the log, so the
        # padded garbage contributes exactly 0 to both partial sums
        # (0 * log(0 + eps) == 0).
        row = (pl.program_id(0) * tn
               + jax.lax.broadcasted_iota(jnp.int32, x.shape, 0))
        x = jnp.where(row < n_total, x, 0.0)

    out_ref[0:1, :] = jnp.sum(x, axis=0, keepdims=True)                     # (1, D)
    out_ref[1:2, :] = jnp.sum(x * jnp.log(x + eps), axis=0, keepdims=True)  # (1, D)


def _pick_row_tile(n: int, d: int, itemsize: int) -> int:
    """Row tile sized for ~2 MiB per (double-buffered) input block, cap 1024 rows."""
    target = (2 * 1024 * 1024) // max(1, d * itemsize)
    tn = min(n, 1024, max(8, target))
    if tn < n:
        tn = max(8, (tn // 8) * 8)      # sublane-aligned when not full extent
    return tn


def jsd(x, eps: float = 1e-8, *, row_tile: int | None = None):
    """Pallas implementation of JSD.forward. x: (N, D) array. Returns f32 scalar."""
    assert x.ndim == 2, "kernel expects 2-D input (N, D)"
    n, d = x.shape
    itemsize = jnp.dtype(x.dtype).itemsize

    tn = row_tile if row_tile is not None else _pick_row_tile(n, d, itemsize)
    tn = min(tn, n)
    if tn < n:
        tn = max(8, (tn // 8) * 8)
    num_tiles = -(-n // tn)
    need_mask = (n % tn) != 0

    kernel = functools.partial(
        _jsd_partials_kernel,
        eps=float(eps), n_total=n, tn=tn, need_mask=need_mask)

    cost = pl.CostEstimate(
        flops=3 * n * d + 4 * d,
        transcendentals=n * d + d,
        bytes_accessed=n * d * itemsize + num_tiles * 2 * d * 4 + 4,
    )

    # Kernel: per-tile partial column sums -> (num_tiles, 2, D) f32.
    partials = pl.pallas_call(
        kernel,
        out_shape=jax.ShapeDtypeStruct((num_tiles, 2, d), jnp.float32),
        grid_spec=pltpu.PrefetchScalarGridSpec(
            num_scalar_prefetch=0,
            grid=(num_tiles,),
            in_specs=[pl.BlockSpec((tn, d), lambda i: (i, 0))],
            out_specs=pl.BlockSpec((None, 2, d), lambda i: (i, 0, 0)),
        ),
        compiler_params=pltpu.CompilerParams(
            dimension_semantics=("parallel",)),    # megacore-splittable on v7x
        cost_estimate=cost,
    )(x)

    # Tiny epilogue (O(num_tiles * D)) in plain JAX.
    col_sum = jnp.sum(partials[:, 0, :], axis=0)      # (D,)  sum over all rows
    xlogx_sum = jnp.sum(partials[:, 1, :], axis=0)    # (D,)  sum of x*log(x+eps)

    n_f = float(n)
    log_n = math.log(n_f)                             # static (shape-derived)
    y = col_sum * (1.0 / n_f)                         # mean over rows
    y_term = jnp.sum(y * jnp.log(y + eps)) / log_n
    x_term = jnp.sum(xlogx_sum) / (log_n * n_f)
    return (1.0 - x_term + y_term).astype(jnp.float32)


def _jsd_reference(x, eps: float = 1e-8):
    """Pure-JAX reference mirroring the PyTorch module."""
    x = x.astype(jnp.float32)
    log_n = math.log(float(x.shape[0]))
    y = jnp.mean(x, axis=0)
    y_term = jnp.sum(y * jnp.log(y + eps) / log_n)
    x_term = jnp.mean(jnp.sum(x * jnp.log(x + eps) / log_n, axis=1))
    return 1.0 - x_term + y_term


if __name__ == "__main__":
    key = jax.random.PRNGKey(0)

    # Case 1: N divisible by the row tile (multi-tile, parallel partials).
    N, D = 128, 256
    logits = jax.random.normal(key, (N, D), dtype=jnp.float32)
    x = jax.nn.softmax(logits, axis=-1)
    out = jax.block_until_ready(jsd(x, row_tile=32))
    ref = jax.block_until_ready(_jsd_reference(x))
    assert jnp.allclose(out, ref, rtol=1e-5, atol=1e-5), (out, ref)

    # Case 2: N not divisible by the row tile (exercises the mask path).
    N2 = 100
    logits2 = jax.random.normal(jax.random.PRNGKey(1), (N2, D), dtype=jnp.float32)
    x2 = jax.nn.softmax(logits2, axis=-1)
    out2 = jax.block_until_ready(jsd(x2, row_tile=32))
    ref2 = jax.block_until_ready(_jsd_reference(x2))
    assert jnp.allclose(out2, ref2, rtol=1e-5, atol=1e-5), (out2, ref2)

    # Case 3: default (auto) tile -> whole array in a single block.
    out3 = jax.block_until_ready(jsd(x))
    assert jnp.allclose(out3, ref, rtol=1e-5, atol=1e-5), (out3, ref)

    print("KERNEL_OK")
</pallas_src>

<mosaic_0001>
module attributes {stable_mosaic.version = 11 : i64} {
  func.func @_jsd_partials_kernel(%arg0: i32, %arg1: memref<32x256xf32, #tpu.memory_space<vmem>>, %arg2: memref<1x2x256xf32, #tpu.memory_space<vmem>>) attributes {dimension_semantics = [#tpu.dimension_semantics<parallel>], iteration_bounds = array<i64: 4>, scalar_prefetch = 0 : i64, scratch_operands = 0 : i64, tpu.core_type = #tpu.core_type<tc>, window_params = [{transform_indices = @transform_0, window_bounds = array<i64: 32, 256>}, {transform_indices = @transform_1, window_bounds = array<i64: 1, 2, 256>}]} {
    %c0 = arith.constant 0 : index
    %c0_0 = arith.constant 0 : index
    %0 = vector.load %arg1[%c0, %c0_0] : memref<32x256xf32, #tpu.memory_space<vmem>>, vector<32x256xf32>
    %cst = arith.constant dense<0.000000e+00> : vector<256xf32>
    %1 = vector.multi_reduction <add>, %0, %cst [0] : vector<32x256xf32> to vector<256xf32>
    %2 = vector.shape_cast %1 : vector<256xf32> to vector<1x256xf32>
    %c0_1 = arith.constant 0 : index
    %c0_2 = arith.constant 0 : index
    %c0_3 = arith.constant 0 : index
    %3 = vector.load %arg2[%c0_1, %c0_2, %c0_3] : memref<1x2x256xf32, #tpu.memory_space<vmem>>, vector<1x1x256xf32>
    %4 = vector.shape_cast %3 : vector<1x1x256xf32> to vector<1x256xf32>
    %5 = vector.shape_cast %2 : vector<1x256xf32> to vector<1x1x256xf32>
    tpu.vector_store %arg2[%c0_1, %c0_2, %c0_3], %5 {strides = array<i32>} : memref<1x2x256xf32, #tpu.memory_space<vmem>>, vector<1x1x256xf32>,
    %cst_4 = arith.constant 9.99999993E-9 : f32
    %6 = vector.broadcast %cst_4 : f32 to vector<32x256xf32>
    %7 = arith.addf %0, %6 : vector<32x256xf32>
    %8 = math.log %7 : vector<32x256xf32>
    %9 = arith.mulf %0, %8 : vector<32x256xf32>
    %cst_5 = arith.constant dense<0.000000e+00> : vector<256xf32>
    %10 = vector.multi_reduction <add>, %9, %cst_5 [0] : vector<32x256xf32> to vector<256xf32>
    %11 = vector.shape_cast %10 : vector<256xf32> to vector<1x256xf32>
    %c0_6 = arith.constant 0 : index
    %c1 = arith.constant 1 : index
    %c0_7 = arith.constant 0 : index
    %12 = vector.load %arg2[%c0_6, %c1, %c0_7] : memref<1x2x256xf32, #tpu.memory_space<vmem>>, vector<1x1x256xf32>
    %13 = vector.shape_cast %12 : vector<1x1x256xf32> to vector<1x256xf32>
    %14 = vector.shape_cast %11 : vector<1x256xf32> to vector<1x1x256xf32>
    tpu.vector_store %arg2[%c0_6, %c1, %c0_7], %14 {strides = array<i32>} : memref<1x2x256xf32, #tpu.memory_space<vmem>>, vector<1x1x256xf32>,
    return
  }
  func.func @transform_0(%arg0: i32) -> (i32, i32) {
    %c0_i32 = arith.constant 0 : i32
    %c0_i32_0 = arith.constant 0 : i32
    return %arg0, %c0_i32 : i32, i32
  }
  func.func @transform_1(%arg0: i32) -> (i32, i32, i32) {
    %c0_i32 = arith.constant 0 : i32
    %c0_i32_0 = arith.constant 0 : i32
    %c0_i32_1 = arith.constant 0 : i32
    return %arg0, %c0_i32, %c0_i32_0 : i32, i32, i32
  }
}

</mosaic_0001>

<llo_original>
// kernel: tpu_custom_call.1
$region0: #{tpu_custom_call.1}
  #allocation0 [shape = 'u32[]', space=smem, size = 0x4, offset = 0x4, fixed_abs, tag = 'smem constant byte address 0x4 - core index']
  #allocation1 [shape = 'u32[144,128]{1,0:T(1,128)}', space=vmem, size = 0x12000, scoped, tag = 'internal scratch']
  %s0 = inlined_call_operand.hbm [shape: f32[128,256], index: 0, kind: input, shape index: {}]
  %s1 = inlined_call_operand.hbm [shape: f32[4,2,256], index: 1, kind: output, shape index: {}]
  %s2 = sld [smem:[#allocation0]]
  $region41: #{tpu_custom_call.1} parent=0
    _
  %s4 = ssub.s32 1, %s2
  %s5 = scalar_select 0, %s4, %s2
  $region1: #{tpu_custom_call.1} parent=0
    #allocation2 [shape = 'u8[65536]{0}', space=vmem, size = 0x10000, scoped, tag = 'input window, operand 0']
    #allocation3 [shape = 's32[2]{0}', space=sflag, size = 0x8, scoped, tag = 'scoped memory for tpu_custom_call.1']
    #allocation4 [shape = 's32[2]{0}', space=sflag, size = 0x8, scoped, tag = 'scoped memory for tpu_custom_call.1']
    #allocation5 [shape = 'u8[4096]{0}', space=vmem, size = 0x1000, scoped, tag = 'output window, operand 0']
    %6 = vsyncpa [#allocation3], 0
    %s7 = scalar_lea.sflag [#allocation3], 1
    %8 = vsyncpa %s7, 0
    %9 = vsyncpa [#allocation4], 0
    %s10 = scalar_lea.sflag [#allocation4], 1
    %11 = vsyncpa %s10, 0
    loop: start=0, step=1, limit=6
    $region2: #{tpu_custom_call.1} parent=1 // loop_pre_header
      _
    $region3: #{tpu_custom_call.1} parent=1 // loop_header
      %s13 = sphi 0, %s17
      %p14 = scmp.ge.s32.totalorder %s13, 6
      %s23 = sphi 0, %s25
      %s26 = sphi 0, %s23
      %s27 = sphi 0, %s26
      %s43 = sphi 0, %s27
      %s49 = sphi 0, %s51
      %s52 = sphi 0, %s49
      %s53 = sphi 0, %s52
      %s69 = sphi 0, %s53
    $region4: #{tpu_custom_call.1} parent=1 // loop_header_branch
      %16 = sbr.rel (%p14) target = $region8
    $region5: #{tpu_custom_call.1} parent=1 // loop_body
      %s18 = ssub.s32 %s13, 1
      %s19 = ssub.s32 %s13, 2
      %s20 = sadd.s32 %s13, 1
      %s21 = ssub.s32 %s13, %s20
      %p22 = scmp.eq.s32.totalorder %s21, 0
      %s24 = sadd.s32 %s23, 1
      %s25 = scalar_select %p22, %s23, %s24
      %p28 = pneg %p22
      %p29 = scmp.eq.s32.totalorder %s13, 3
      %p30 = por %p28, %p29
      %p31 = scmp.ne.s32.totalorder %s23, %s26
      %p32 = scmp.eq.s32.totalorder %s13, 0
      %p33 = por %p31, %p32
      %p34 = scmp.ne.s32.totalorder %s23, %s26
      %p35 = scmp.eq.s32.totalorder %s18, 3
      %p36 = por %p34, %p35
      %p37 = scmp.ne.s32.totalorder %s26, %s27
      %p38 = scmp.eq.s32.totalorder %s18, 0
      %p39 = por %p37, %p38
      %p40 = scmp.ne.s32.totalorder %s26, %s27
      %p41 = scmp.eq.s32.totalorder %s19, 3
      %p42 = por %p40, %p41
      %p44 = scmp.ne.s32.totalorder %s27, %s43
      %p45 = scmp.eq.s32.totalorder %s19, 0
      %p46 = por %p44, %p45
      %s47 = ssub.s32 %s13, %s20
      %p48 = scmp.eq.s32.totalorder %s47, 0
      %s50 = sadd.s32 %s49, 1
      %s51 = scalar_select %p48, %s49, %s50
      %p54 = pneg %p48
      %p55 = scmp.eq.s32.totalorder %s13, 3
      %p56 = por %p54, %p55
      %p57 = scmp.ne.s32.totalorder %s49, %s52
      %p58 = scmp.eq.s32.totalorder %s13, 0
      %p59 = por %p57, %p58
      %p60 = scmp.ne.s32.totalorder %s49, %s52
      %p61 = scmp.eq.s32.totalorder %s18, 3
      %p62 = por %p60, %p61
      %p63 = scmp.ne.s32.totalorder %s52, %s53
      %p64 = scmp.eq.s32.totalorder %s18, 0
      %p65 = por %p63, %p64
      %p66 = scmp.ne.s32.totalorder %s52, %s53
      %p67 = scmp.eq.s32.totalorder %s19, 3
      %p68 = por %p66, %p67
      %p70 = scmp.ne.s32.totalorder %s53, %s69
      %p71 = scmp.eq.s32.totalorder %s19, 0
      %p72 = por %p70, %p71
      %p73 = scmp.le.s32.totalorder 1, %s13
      %p74 = scmp.lt.s32.totalorder %s13, 5
      %p75 = pnand %p73, %p74
      %p76 = pneg %p75
      // Predicated region
      $region9: #{tpu_custom_call.1} parent=5 // pred_check
        _
      $region10: #{tpu_custom_call.1} parent=5 // pred_check_branch
        %78 = sbr.rel (%p75) target = $region12
      $region11: #{tpu_custom_call.1} parent=5 // pred_region
        %s79 = ssub.s32 %s13, 1
      $region12: #{tpu_custom_call.1} parent=5 // pred_fallthru
        _
      %p80 = scmp.lt.s32.totalorder %s13, 4
      // Predicated region
      $region13: #{tpu_custom_call.1} parent=5 // pred_check
        %p81 = pneg %p80
      $region14: #{tpu_custom_call.1} parent=5 // pred_check_branch
        %83 = sbr.rel (%p81) target = $region16
      $region15: #{tpu_custom_call.1} parent=5 // pred_region
        // Predicated region
        $region17: #{tpu_custom_call.1} parent=15 // pred_check
          %p84 = pneg %p33
        $region18: #{tpu_custom_call.1} parent=15 // pred_check_branch
          %86 = sbr.rel (%p84) target = $region20
        $region19: #{tpu_custom_call.1} parent=15 // pred_region
          %s87 = sand.u32 %s23, 1
          %s88 = scalar_lea.sflag [#allocation3], %s87
          %s89 = sand.u32 %s23, 1
          %s90 = smul.addr %s89, 64
          %s91 = scalar_lea.vmem [#allocation2], %s90
          %s92 = smul.u32 4, %s13
          %s94 = ssub.s32 1024, 1024
          %95 = vsyncadd %s88, %s94
          %s96 = smul.addr %s92, 2
          %s97 = smul.addr %s96, 128
          %s98 = scalar_lea.hbm %s0, %s97
          %s99 = sshll.u32 %s91, 4
          %s100 = int_to_ptr.vmem [resolvable:$true] %s99
          %105 = dma.hbm_to_vmem [thread:$0]  %s98, 1024, %s100, %s88, 256, 256, 16
        $region20: #{tpu_custom_call.1} parent=15 // pred_fallthru
          _
      $region16: #{tpu_custom_call.1} parent=5 // pred_fallthru
        _
      %p106 = scmp.le.s32.totalorder 1, %s13
      %p107 = scmp.lt.s32.totalorder %s13, 5
      %p108 = pnand %p106, %p107
      %p109 = pneg %p108
      // Predicated region
      $region21: #{tpu_custom_call.1} parent=5 // pred_check
        _
      $region22: #{tpu_custom_call.1} parent=5 // pred_check_branch
        %111 = sbr.rel (%p108) target = $region24
      $region23: #{tpu_custom_call.1} parent=5 // pred_region
        %s112 = ssub.s32 %s13, 1
        %s113 = sand.u32 %s26, 1
        %s114 = scalar_lea.sflag [#allocation3], %s113
        %s115 = sand.u32 %s26, 1
        %s116 = smul.addr %s115, 64
        %s117 = scalar_lea.vmem [#allocation2], %s116
        // Predicated region
        $region25: #{tpu_custom_call.1} parent=23 // pred_check
          %p118 = pneg %p39
        $region26: #{tpu_custom_call.1} parent=23 // pred_check_branch
          %120 = sbr.rel (%p118) target = $region28
        $region27: #{tpu_custom_call.1} parent=23 // pred_region
          %121 = dma.done %s114, 1024
        $region28: #{tpu_custom_call.1} parent=23 // pred_fallthru
          _
        %s122 = sand.u32 %s26, 1
        %s123 = scalar_lea.sflag [#allocation3], %s122
        %s124 = sand.u32 %s26, 1
        %s125 = smul.addr %s124, 64
        %s126 = scalar_lea.vmem [#allocation2], %s125
        %p127 = pneg %p39
        %p128 = pneg %p36
        %p129 = pneg %p65
        %p130 = pneg %p62
        %s131 = sand.u32 %s52, 1
        %s132 = scalar_lea.sflag [#allocation4], %s131
        %s133 = sand.u32 %s52, 1
        %s134 = smul.addr %s133, 4
        %s135 = scalar_lea.vmem [#allocation5], %s134
        %s136 = smul.u32 4, %s18
        %v137 = vld [vmem:[%s117] sm:$0xff]
        %v138 = vld [vmem:[%s117 + $0x8] sm:$0xff]
        %v139 = vld [vmem:[%s117 + $0x10] sm:$0xff]
        %v140 = vld [vmem:[%s117 + $0x18] sm:$0xff]
        %v141 = vld [vmem:[%s117 + $0x20] sm:$0xff]
        %v142 = vld [vmem:[%s117 + $0x28] sm:$0xff]
        %v143 = vld [vmem:[%s117 + $0x30] sm:$0xff]
        %v144 = vld [vmem:[%s117 + $0x38] sm:$0xff]
        %v145 = vadd.f32 %v137, %v139
        %v146 = vadd.f32 %v145, %v141
        %v147 = vadd.f32 %v146, %v143
        %v148 = vrot.slane %v147, 4
        %v149 = vadd.f32 %v147, %v148
        %v150 = vrot.slane %v149, 2
        %v151 = vadd.f32 %v149, %v150
        %v152 = vrot.slane %v151, 1
        %v153 = vadd.f32 %v151, %v152
        %v154 = vadd.f32 %v138, %v140
        %v155 = vadd.f32 %v154, %v142
        %v156 = vadd.f32 %v155, %v144
        %v157 = vrot.slane %v156, 4
        %v158 = vadd.f32 %v156, %v157
        %v159 = vrot.slane %v158, 2
        %v160 = vadd.f32 %v158, %v159
        %v161 = vrot.slane %v160, 1
        %v162 = vadd.f32 %v160, %v161
        %v165 = vcombine.low %v153, %v162
        %v167 = vunpack.c.l.s4 1966171168
        %v168 = vunpack.c.0.s8 %v167
        %v169 = vlaneseq
        %v170 = vshrl.u32 %v169, 7
        %v171 = vsub.s32 %v168, %v170
        %v172 = vrot.slane %v165, %v171
        %v174 = vunpack.c.l.s4 1966171168
        %v175 = vunpack.c.0.s8 %v174
        %v176 = vlaneseq
        %v177 = vshrl.u32 %v176, 7
        %v178 = vsub.s32 %v175, %v177
        %v179 = vrot.slane %v172, %v178
        %v181 = vlaneseq
        %vm182 = vcmp.ge.s32.totalorder %v181, 0
        %vm183 = vcmp.lt.s32.totalorder %v181, 256
        %vm184 = vmand %vm182, %vm183
        %185 = vst.msk [vmem:[%s135] ss:$2 sm:$0x3] %vm184, %v179
        %v186 = vadd.f32 %v137, 1e-08
        %v187 = vadd.f32 %v138, 1e-08
        %v188 = vadd.f32 %v139, 1e-08
        %v189 = vadd.f32 %v140, 1e-08
        %v190 = vadd.f32 %v141, 1e-08
        %v191 = vadd.f32 %v142, 1e-08
        %v192 = vadd.f32 %v143, 1e-08
        %v193 = vadd.f32 %v144, 1e-08
        %v194 = vlog2.pop %v186
        %v195 = vmul.f32 %v194, 0.6931472
        %v196 = vlog2.pop %v187
        %v197 = vmul.f32 %v196, 0.6931472
        %v198 = vlog2.pop %v188
        %v199 = vmul.f32 %v198, 0.6931472
        %v200 = vlog2.pop %v189
        %v201 = vmul.f32 %v200, 0.6931472
        %v202 = vlog2.pop %v190
        %v203 = vmul.f32 %v202, 0.6931472
        %v204 = vlog2.pop %v191
        %v205 = vmul.f32 %v204, 0.6931472
        %v206 = vlog2.pop %v192
        %v207 = vmul.f32 %v206, 0.6931472
        %v208 = vlog2.pop %v193
        %v209 = vmul.f32 %v208, 0.6931472
        %v210 = vmul.f32 %v137, %v195
        %v211 = vmul.f32 %v138, %v197
        %v212 = vmul.f32 %v139, %v199
        %v213 = vmul.f32 %v140, %v201
        %v214 = vmul.f32 %v141, %v203
        %v215 = vmul.f32 %v142, %v205
        %v216 = vmul.f32 %v143, %v207
        %v217 = vmul.f32 %v144, %v209
        %v218 = vadd.f32 %v210, %v212
        %v219 = vadd.f32 %v218, %v214
        %v220 = vadd.f32 %v219, %v216
        %v221 = vrot.slane %v220, 4
        %v222 = vadd.f32 %v220, %v221
        %v223 = vrot.slane %v222, 2
        %v224 = vadd.f32 %v222, %v223
        %v225 = vrot.slane %v224, 1
        %v226 = vadd.f32 %v224, %v225
        %v227 = vadd.f32 %v211, %v213
        %v228 = vadd.f32 %v227, %v215
        %v229 = vadd.f32 %v228, %v217
        %v230 = vrot.slane %v229, 4
        %v231 = vadd.f32 %v229, %v230
        %v232 = vrot.slane %v231, 2
        %v233 = vadd.f32 %v231, %v232
        %v234 = vrot.slane %v233, 1
        %v235 = vadd.f32 %v233, %v234
        %v238 = vcombine.low %v226, %v235
        %v240 = vunpack.c.l.s4 1966171168
        %v241 = vunpack.c.0.s8 %v240
        %v242 = vlaneseq
        %v243 = vshrl.u32 %v242, 7
        %v244 = vsub.s32 %v241, %v243
        %v245 = vrot.slane %v238, %v244
        %v247 = vunpack.c.l.s4 1966171168
        %v248 = vunpack.c.0.s8 %v247
        %v249 = vlaneseq
        %v250 = vshrl.u32 %v249, 7
        %v251 = vsub.s32 %v248, %v250
        %v252 = vrot.slane %v245, %v251
        %s254 = scalar_lea.vmem %s135, 1 [#allocation5]
        %255 = vst.msk [vmem:[%s254] ss:$2 sm:$0x3] %vm184, %v252
        %s256 = sand.u32 %s52, 1
        %s257 = scalar_lea.sflag [#allocation4], %s256
        %s258 = sand.u32 %s52, 1
        %s259 = smul.addr %s258, 4
        %s260 = scalar_lea.vmem [#allocation5], %s259
        // Predicated region
        $region29: #{tpu_custom_call.1} parent=23 // pred_check
          %p261 = pneg %p62
        $region30: #{tpu_custom_call.1} parent=23 // pred_check_branch
          %263 = sbr.rel (%p261) target = $region32
        $region31: #{tpu_custom_call.1} parent=23 // pred_region
          %s265 = ssub.s32 64, 64
          %266 = vsyncadd %s257, %s265
          %s267 = smul.addr %s18, 2
          %s268 = smul.addr %s267, 32
          %s269 = scalar_lea.hbm %s1, %s268
          %s271 = sshll.u32 %s260, 4
          %s272 = int_to_ptr.vmem [resolvable:$true] %s271
          %274 = dma.vmem_to_hbm [thread:$0]  %s272, 64, %s269, %s257
        $region32: #{tpu_custom_call.1} parent=23 // pred_fallthru
          _
      $region24: #{tpu_custom_call.1} parent=5 // pred_fallthru
        _
      %p275 = scmp.le.s32.totalorder 2, %s13
      // Predicated region
      $region33: #{tpu_custom_call.1} parent=5 // pred_check
        %p276 = pneg %p275
      $region34: #{tpu_custom_call.1} parent=5 // pred_check_branch
        %278 = sbr.rel (%p276) target = $region36
      $region35: #{tpu_custom_call.1} parent=5 // pred_region
        %s279 = ssub.s32 %s13, 2
        // Predicated region
        $region37: #{tpu_custom_call.1} parent=35 // pred_check
          %p280 = pneg %p68
        $region38: #{tpu_custom_call.1} parent=35 // pred_check_branch
          %282 = sbr.rel (%p280) target = $region40
        $region39: #{tpu_custom_call.1} parent=35 // pred_region
          %s283 = sand.u32 %s53, 1
          %s284 = scalar_lea.sflag [#allocation4], %s283
          %s285 = sand.u32 %s53, 1
          %s286 = smul.addr %s285, 4
          %s287 = scalar_lea.vmem [#allocation5], %s286
          %288 = dma.done %s284, 64
        $region40: #{tpu_custom_call.1} parent=35 // pred_fallthru
          _
      $region36: #{tpu_custom_call.1} parent=5 // pred_fallthru
        _
    $region6: #{tpu_custom_call.1} parent=1 // loop_footer
      %s17 = sadd.s32 1, %s13
    $region7: #{tpu_custom_call.1} parent=1 // loop_footer_branch
      %12 = sbr.rel target = $region3
    $region8: #{tpu_custom_call.1} parent=1 // loop_exit
      _
    %289 = vsyncpa [#allocation3], 1
    %s290 = scalar_lea.sflag [#allocation3], 1
    %291 = vsyncpa %s290, 1
    %292 = vsyncpa [#allocation4], 1
    %s293 = scalar_lea.sflag [#allocation4], 1
    %294 = vsyncpa %s293, 1

</llo_original>
